<compile_context>
chip_gen: v7x
topology: tpu7x:2x2x1
jax: 0.10.0
libtpu: 0.0.40
codegen_flags: <defaults>
</compile_context>

<pallas_src>
import jax
import jax.numpy as jnp
from jax import lax
from jax.experimental import pallas as pl
from jax.experimental.pallas import tpu as pltpu


def _const_vel_kernel(lens_ref, batch_ref, out_ref):
    """Single-invocation constant-velocity predictor.

    lens_ref : VMEM (B, D) int32        -- per-batch lengths broadcast over joint dims
                                           (pre-clamped to [2, T] in the wrapper)
    batch_ref: VMEM (T, B, D)           -- past poses, time-major, native layout
    out_ref  : VMEM (out_len, B, D)     -- predictions, written directly (no relayout)
    """
    out_len, B, D = out_ref.shape
    T = batch_ref.shape[0]

    x = batch_ref[...].astype(jnp.float32)          # (T, B, D)
    L = lens_ref[...][None, :, :]                   # (1, B, D) int32

    # Vectorized mask-and-reduce gather of the last / second-to-last known frames.
    # Pure VPU: compare + select + add over T planes, parallel across all (B, D) lanes.
    t_idx = lax.broadcasted_iota(jnp.int32, (T, B, D), 0)
    last = jnp.sum(jnp.where(t_idx == L - 1, x, 0.0), axis=0, keepdims=True)   # (1, B, D)
    sec = jnp.sum(jnp.where(t_idx == L - 2, x, 0.0), axis=0, keepdims=True)    # (1, B, D)
    diff = last - sec

    # out[t] = last + (t+1) * diff ; steps is a full-shape iota (no lane broadcast).
    steps = (lax.broadcasted_iota(jnp.int32, (out_len, B, D), 0) + 1).astype(jnp.float32)
    out_ref[...] = (last + steps * diff).astype(out_ref.dtype)


def const_velocity_baseline(batch, lengths, output_length=30):
    """batch: (T, B, D) float, lengths: (B,) int.  Returns (output_length, B, D)."""
    T, B, D = batch.shape
    itemsize = jnp.dtype(batch.dtype).itemsize

    # Clamp (PyTorch precondition is 2 <= lengths[b] <= T) and lane-expand the lengths
    # so the in-kernel gather is fully vectorized — no SMEM scalar chain in the kernel.
    L_bd = jnp.broadcast_to(
        jnp.clip(lengths.astype(jnp.int32), 2, T)[:, None], (B, D))

    return pl.pallas_call(
        _const_vel_kernel,
        out_shape=jax.ShapeDtypeStruct((output_length, B, D), batch.dtype),
        grid=(1,),  # single step, single TensorCore: everything resident in VMEM
        in_specs=[
            pl.BlockSpec((B, D), lambda i: (0, 0)),
            pl.BlockSpec((T, B, D), lambda i: (0, 0, 0)),
        ],
        out_specs=pl.BlockSpec((output_length, B, D), lambda i: (0, 0, 0)),
        compiler_params=pltpu.CompilerParams(
            dimension_semantics=("arbitrary",),
        ),
        cost_estimate=pl.CostEstimate(
            flops=4 * T * B * D + 3 * output_length * B * D,
            transcendentals=0,
            bytes_accessed=(T * B * D + output_length * B * D) * itemsize + 4 * B * D,
        ),
    )(L_bd, batch)


if __name__ == "__main__":
    key = jax.random.PRNGKey(0)
    T, B, D = 8, 4, 96  # seq=8, batch=4, joint-dims=96 (32 joints x 3)
    OUTPUT_LENGTH = 30

    batch = jax.random.normal(key, (T, B, D), dtype=jnp.float32)
    lengths = jnp.array([8, 5, 3, 7], dtype=jnp.int32)  # each in [2, T]

    out = const_velocity_baseline(batch, lengths, output_length=OUTPUT_LENGTH)
    out = jax.block_until_ready(out)

    # Pure-JAX reference (mirrors the PyTorch forward).
    idx = jnp.arange(B)
    last = batch[lengths - 1, idx, :]
    sec_to_last = batch[lengths - 2, idx, :]
    diff = last - sec_to_last
    steps = (jnp.arange(OUTPUT_LENGTH, dtype=jnp.float32) + 1.0)[:, None, None]
    ref = last[None, :, :] + steps * diff[None, :, :]

    assert out.shape == (OUTPUT_LENGTH, B, D), out.shape
    assert out.dtype == batch.dtype, out.dtype
    assert jnp.allclose(out, ref, atol=1e-5, rtol=1e-5), float(jnp.max(jnp.abs(out - ref)))

    print("KERNEL_OK")
</pallas_src>

<mosaic_0001>
module attributes {stable_mosaic.version = 11 : i64} {
  func.func @_const_vel_kernel(%arg0: i32, %arg1: memref<4x96xi32, #tpu.memory_space<vmem>>, %arg2: memref<8x4x96xf32, #tpu.memory_space<vmem>>, %arg3: memref<30x4x96xf32, #tpu.memory_space<vmem>>) attributes {dimension_semantics = [#tpu.dimension_semantics<arbitrary>], iteration_bounds = array<i64: 1>, scalar_prefetch = 0 : i64, scratch_operands = 0 : i64, tpu.core_type = #tpu.core_type<tc>, window_params = [{pipeline_mode = #tpu.pipeline_mode<synchronous>, transform_indices = @transform_0, window_bounds = array<i64: 4, 96>}, {pipeline_mode = #tpu.pipeline_mode<synchronous>, transform_indices = @transform_1, window_bounds = array<i64: 8, 4, 96>}, {pipeline_mode = #tpu.pipeline_mode<synchronous>, transform_indices = @transform_2, window_bounds = array<i64: 30, 4, 96>}]} {
    %c0 = arith.constant 0 : index
    %c0_0 = arith.constant 0 : index
    %c0_1 = arith.constant 0 : index
    %0 = vector.load %arg2[%c0, %c0_0, %c0_1] : memref<8x4x96xf32, #tpu.memory_space<vmem>>, vector<8x4x96xf32>
    %c0_2 = arith.constant 0 : index
    %c0_3 = arith.constant 0 : index
    %1 = vector.load %arg1[%c0_2, %c0_3] : memref<4x96xi32, #tpu.memory_space<vmem>>, vector<4x96xi32>
    %2 = vector.shape_cast %1 : vector<4x96xi32> to vector<1x4x96xi32>
    %3 = tpu.iota {dimensions = array<i32: 0>} : vector<8x4x96xi32>
    %c1_i32 = arith.constant 1 : i32
    %4 = vector.broadcast %c1_i32 : i32 to vector<1x4x96xi32>
    %5 = arith.subi %2, %4 : vector<1x4x96xi32>
    %6 = vector.broadcast %5 : vector<1x4x96xi32> to vector<8x4x96xi32>
    %7 = arith.cmpi eq, %3, %6 : vector<8x4x96xi32>
    %cst = arith.constant 0.000000e+00 : f32
    %8 = vector.broadcast %cst : f32 to vector<8x4x96xf32>
    %9 = arith.select %7, %0, %8 : vector<8x4x96xi1>, vector<8x4x96xf32>
    %cst_4 = arith.constant dense<0.000000e+00> : vector<4x96xf32>
    %10 = vector.multi_reduction <add>, %9, %cst_4 [0] : vector<8x4x96xf32> to vector<4x96xf32>
    %11 = vector.shape_cast %10 : vector<4x96xf32> to vector<1x4x96xf32>
    %c2_i32 = arith.constant 2 : i32
    %12 = vector.broadcast %c2_i32 : i32 to vector<1x4x96xi32>
    %13 = arith.subi %2, %12 : vector<1x4x96xi32>
    %14 = vector.broadcast %13 : vector<1x4x96xi32> to vector<8x4x96xi32>
    %15 = arith.cmpi eq, %3, %14 : vector<8x4x96xi32>
    %cst_5 = arith.constant 0.000000e+00 : f32
    %16 = vector.broadcast %cst_5 : f32 to vector<8x4x96xf32>
    %17 = arith.select %15, %0, %16 : vector<8x4x96xi1>, vector<8x4x96xf32>
    %cst_6 = arith.constant dense<0.000000e+00> : vector<4x96xf32>
    %18 = vector.multi_reduction <add>, %17, %cst_6 [0] : vector<8x4x96xf32> to vector<4x96xf32>
    %19 = vector.shape_cast %18 : vector<4x96xf32> to vector<1x4x96xf32>
    %20 = arith.subf %11, %19 : vector<1x4x96xf32>
    %21 = tpu.iota {dimensions = array<i32: 0>} : vector<30x4x96xi32>
    %c1_i32_7 = arith.constant 1 : i32
    %22 = vector.broadcast %c1_i32_7 : i32 to vector<30x4x96xi32>
    %23 = arith.addi %21, %22 : vector<30x4x96xi32>
    %24 = arith.sitofp %23 : vector<30x4x96xi32> to vector<30x4x96xf32>
    %25 = vector.broadcast %20 : vector<1x4x96xf32> to vector<30x4x96xf32>
    %26 = arith.mulf %24, %25 : vector<30x4x96xf32>
    %27 = vector.broadcast %11 : vector<1x4x96xf32> to vector<30x4x96xf32>
    %28 = arith.addf %27, %26 : vector<30x4x96xf32>
    %c0_8 = arith.constant 0 : index
    %c0_9 = arith.constant 0 : index
    %c0_10 = arith.constant 0 : index
    %29 = vector.load %arg3[%c0_8, %c0_9, %c0_10] : memref<30x4x96xf32, #tpu.memory_space<vmem>>, vector<30x4x96xf32>
    tpu.vector_store %arg3[%c0_8, %c0_9, %c0_10], %28 {strides = array<i32>} : memref<30x4x96xf32, #tpu.memory_space<vmem>>, vector<30x4x96xf32>,
    return
  }
  func.func @transform_0(%arg0: i32) -> (i32, i32) {
    %c0_i32 = arith.constant 0 : i32
    %c0_i32_0 = arith.constant 0 : i32
    %c0_i32_1 = arith.constant 0 : i32
    return %c0_i32, %c0_i32_0 : i32, i32
  }
  func.func @transform_1(%arg0: i32) -> (i32, i32, i32) {
    %c0_i32 = arith.constant 0 : i32
    %c0_i32_0 = arith.constant 0 : i32
    %c0_i32_1 = arith.constant 0 : i32
    %c0_i32_2 = arith.constant 0 : i32
    return %c0_i32, %c0_i32_0, %c0_i32_1 : i32, i32, i32
  }
  func.func @transform_2(%arg0: i32) -> (i32, i32, i32) {
    %c0_i32 = arith.constant 0 : i32
    %c0_i32_0 = arith.constant 0 : i32
    %c0_i32_1 = arith.constant 0 : i32
    %c0_i32_2 = arith.constant 0 : i32
    return %c0_i32, %c0_i32_0, %c0_i32_1 : i32, i32, i32
  }
}

</mosaic_0001>

<llo_original>
// kernel: tpu_custom_call.1
$region0: #{tpu_custom_call.1}
  #allocation0 [shape = 'u32[]', space=smem, size = 0x4, offset = 0x4, fixed_abs, tag = 'smem constant byte address 0x4 - core index']
  #allocation1 [shape = 'u32[144,128]{1,0:T(1,128)}', space=vmem, size = 0x12000, scoped, tag = 'internal scratch']
  %s0 = inlined_call_operand.hbm [shape: s32[4,96], index: 0, kind: input, shape index: {}]
  %s1 = inlined_call_operand.hbm [shape: f32[8,4,96], index: 1, kind: input, shape index: {}]
  %s2 = inlined_call_operand.hbm [shape: f32[30,4,96], index: 2, kind: output, shape index: {}]
  %s3 = sld [smem:[#allocation0]]
  $region26: #{tpu_custom_call.1} parent=0
    _
  %s5 = ssub.s32 1, %s3
  %s6 = scalar_select 0, %s5, %s3
  $region1: #{tpu_custom_call.1} parent=0
    #allocation2 [shape = 'u8[2048]{0}', space=vmem, size = 0x800, scoped, tag = 'input window, operand 0, single buffered']
    #allocation3 [shape = 's32[1]{0}', space=sflag, size = 0x4, scoped, tag = 'scoped memory for tpu_custom_call.1']
    #allocation4 [shape = 's32[1]{0}', space=sflag, size = 0x4, scoped, tag = 'scoped memory for tpu_custom_call.1']
    #allocation5 [shape = 'u8[16384]{0}', space=vmem, size = 0x4000, scoped, tag = 'input window, operand 1, single buffered']
    #allocation6 [shape = 's32[1]{0}', space=sflag, size = 0x4, scoped, tag = 'scoped memory for tpu_custom_call.1']
    #allocation7 [shape = 'u8[61440]{0}', space=vmem, size = 0xf000, scoped, tag = 'output window, operand 0, single buffered']
    %7 = vsyncpa [#allocation3], 0
    %8 = vsyncpa [#allocation6], 0
    %9 = vsyncpa [#allocation4], 0
    // Predicated region
    $region2: #{tpu_custom_call.1} parent=1 // pred_check
      _
    $region3: #{tpu_custom_call.1} parent=1 // pred_check_branch
      %11 = sbr.rel (0) target = $region5
    $region4: #{tpu_custom_call.1} parent=1 // pred_region
      %s13 = ssub.s32 64, 64
      %14 = vsyncadd [#allocation3], %s13
      %s16 = sshll.u32 [#allocation2], 4
      %s17 = int_to_ptr.vmem [resolvable:$true] %s16
      %19 = dma.hbm_to_vmem [thread:$0]  %s0, 64, %s17, [#allocation3]
    $region5: #{tpu_custom_call.1} parent=1 // pred_fallthru
      _
    // Predicated region
    $region6: #{tpu_custom_call.1} parent=1 // pred_check
      _
    $region7: #{tpu_custom_call.1} parent=1 // pred_check_branch
      %21 = sbr.rel (0) target = $region9
    $region8: #{tpu_custom_call.1} parent=1 // pred_region
      %s23 = ssub.s32 512, 512
      %24 = vsyncadd [#allocation6], %s23
      %s25 = sshll.u32 [#allocation5], 4
      %s26 = int_to_ptr.vmem [resolvable:$true] %s25
      %31 = dma.hbm_to_vmem [thread:$0]  %s1, 512, %s26, [#allocation6], 64, 64, 4
    $region9: #{tpu_custom_call.1} parent=1 // pred_fallthru
      _
    // Predicated region
    $region10: #{tpu_custom_call.1} parent=1 // pred_check
      _
    $region11: #{tpu_custom_call.1} parent=1 // pred_check_branch
      %33 = sbr.rel (0) target = $region13
    $region12: #{tpu_custom_call.1} parent=1 // pred_region
      %34 = dma.done [#allocation3], 64
    $region13: #{tpu_custom_call.1} parent=1 // pred_fallthru
      _
    // Predicated region
    $region14: #{tpu_custom_call.1} parent=1 // pred_check
      _
    $region15: #{tpu_custom_call.1} parent=1 // pred_check_branch
      %36 = sbr.rel (0) target = $region17
    $region16: #{tpu_custom_call.1} parent=1 // pred_region
      %37 = dma.done [#allocation6], 512
    $region17: #{tpu_custom_call.1} parent=1 // pred_fallthru
      _
    %v38 = vld [vmem:[#allocation5] sm:$0xf]
    %v39 = vld [vmem:[#allocation5 + $0x4] sm:$0xf]
    %v40 = vld [vmem:[#allocation5 + $0x8] sm:$0xf]
    %v41 = vld [vmem:[#allocation5 + $0xc] sm:$0xf]
    %v42 = vld [vmem:[#allocation5 + $0x10] sm:$0xf]
    %v43 = vld [vmem:[#allocation5 + $0x14] sm:$0xf]
    %v44 = vld [vmem:[#allocation5 + $0x18] sm:$0xf]
    %v45 = vld [vmem:[#allocation5 + $0x1c] sm:$0xf]
    %v46 = vld [vmem:[#allocation2] sm:$0xf]
    %v47 = vsub.s32 %v46, 1
    %vm48 = vcmp.eq.s32.totalorder %v47, 0
    %vm49 = vcmp.eq.s32.totalorder %v47, 1
    %vm50 = vcmp.eq.s32.totalorder %v47, 2
    %vm51 = vcmp.eq.s32.totalorder %v47, 3
    %vm52 = vcmp.eq.s32.totalorder %v47, 4
    %vm53 = vcmp.eq.s32.totalorder %v47, 5
    %vm54 = vcmp.eq.s32.totalorder %v47, 6
    %vm55 = vcmp.eq.s32.totalorder %v47, 7
    %v56 = vsel %vm48, %v38, 0.0
    %v57 = vsel %vm49, %v39, 0.0
    %v58 = vsel %vm50, %v40, 0.0
    %v59 = vsel %vm51, %v41, 0.0
    %v60 = vsel %vm52, %v42, 0.0
    %v61 = vsel %vm53, %v43, 0.0
    %v62 = vsel %vm54, %v44, 0.0
    %v63 = vsel %vm55, %v45, 0.0
    %vm64 = vcmask 781312
    %v65 = vsel %vm64, %v56, 0.0
    %v66 = vsel %vm64, %v57, 0.0
    %v67 = vadd.f32 %v65, %v66
    %v68 = vsel %vm64, %v58, 0.0
    %v69 = vadd.f32 %v67, %v68
    %v70 = vsel %vm64, %v59, 0.0
    %v71 = vadd.f32 %v69, %v70
    %v72 = vsel %vm64, %v60, 0.0
    %v73 = vadd.f32 %v71, %v72
    %v74 = vsel %vm64, %v61, 0.0
    %v75 = vadd.f32 %v73, %v74
    %v76 = vsel %vm64, %v62, 0.0
    %v77 = vadd.f32 %v75, %v76
    %v78 = vsel %vm64, %v63, 0.0
    %v79 = vadd.f32 %v77, %v78
    %v80 = vsub.s32 %v46, 2
    %vm81 = vcmp.eq.s32.totalorder %v80, 0
    %vm82 = vcmp.eq.s32.totalorder %v80, 1
    %vm83 = vcmp.eq.s32.totalorder %v80, 2
    %vm84 = vcmp.eq.s32.totalorder %v80, 3
    %vm85 = vcmp.eq.s32.totalorder %v80, 4
    %vm86 = vcmp.eq.s32.totalorder %v80, 5
    %vm87 = vcmp.eq.s32.totalorder %v80, 6
    %vm88 = vcmp.eq.s32.totalorder %v80, 7
    %v89 = vsel %vm81, %v38, 0.0
    %v90 = vsel %vm82, %v39, 0.0
    %v91 = vsel %vm83, %v40, 0.0
    %v92 = vsel %vm84, %v41, 0.0
    %v93 = vsel %vm85, %v42, 0.0
    %v94 = vsel %vm86, %v43, 0.0
    %v95 = vsel %vm87, %v44, 0.0
    %v96 = vsel %vm88, %v45, 0.0
    %v97 = vsel %vm64, %v89, 0.0
    %v98 = vsel %vm64, %v90, 0.0
    %v99 = vadd.f32 %v97, %v98
    %v100 = vsel %vm64, %v91, 0.0
    %v101 = vadd.f32 %v99, %v100
    %v102 = vsel %vm64, %v92, 0.0
    %v103 = vadd.f32 %v101, %v102
    %v104 = vsel %vm64, %v93, 0.0
    %v105 = vadd.f32 %v103, %v104
    %v106 = vsel %vm64, %v94, 0.0
    %v107 = vadd.f32 %v105, %v106
    %v108 = vsel %vm64, %v95, 0.0
    %v109 = vadd.f32 %v107, %v108
    %v110 = vsel %vm64, %v96, 0.0
    %v111 = vadd.f32 %v109, %v110
    %v112 = vsub.f32 %v79, %v111
    %v113 = vcvt.s32.f32 1
    %v114 = vcvt.s32.f32 2
    %v115 = vcvt.s32.f32 3
    %v116 = vcvt.s32.f32 4
    %v117 = vcvt.s32.f32 5
    %v118 = vcvt.s32.f32 6
    %v119 = vcvt.s32.f32 7
    %v120 = vcvt.s32.f32 8
    %v121 = vcvt.s32.f32 9
    %v122 = vcvt.s32.f32 10
    %v123 = vcvt.s32.f32 11
    %v124 = vcvt.s32.f32 12
    %v125 = vcvt.s32.f32 13
    %v126 = vcvt.s32.f32 14
    %v127 = vcvt.s32.f32 15
    %v128 = vcvt.s32.f32 16
    %v129 = vcvt.s32.f32 17
    %v130 = vcvt.s32.f32 18
    %v131 = vcvt.s32.f32 19
    %v132 = vcvt.s32.f32 20
    %v133 = vcvt.s32.f32 21
    %v134 = vcvt.s32.f32 22
    %v135 = vcvt.s32.f32 23
    %v136 = vcvt.s32.f32 24
    %v137 = vcvt.s32.f32 25
    %v138 = vcvt.s32.f32 26
    %v139 = vcvt.s32.f32 27
    %v140 = vcvt.s32.f32 28
    %v141 = vcvt.s32.f32 29
    %v142 = vcvt.s32.f32 30
    %v143 = vmul.f32 %v113, %v112
    %v144 = vmul.f32 %v114, %v112
    %v145 = vmul.f32 %v115, %v112
    %v146 = vmul.f32 %v116, %v112
    %v147 = vmul.f32 %v117, %v112
    %v148 = vmul.f32 %v118, %v112
    %v149 = vmul.f32 %v119, %v112
    %v150 = vmul.f32 %v120, %v112
    %v151 = vmul.f32 %v121, %v112
    %v152 = vmul.f32 %v122, %v112
    %v153 = vmul.f32 %v123, %v112
    %v154 = vmul.f32 %v124, %v112
    %v155 = vmul.f32 %v125, %v112
    %v156 = vmul.f32 %v126, %v112
    %v157 = vmul.f32 %v127, %v112
    %v158 = vmul.f32 %v128, %v112
    %v159 = vmul.f32 %v129, %v112
    %v160 = vmul.f32 %v130, %v112
    %v161 = vmul.f32 %v131, %v112
    %v162 = vmul.f32 %v132, %v112
    %v163 = vmul.f32 %v133, %v112
    %v164 = vmul.f32 %v134, %v112
    %v165 = vmul.f32 %v135, %v112
    %v166 = vmul.f32 %v136, %v112
    %v167 = vmul.f32 %v137, %v112
    %v168 = vmul.f32 %v138, %v112
    %v169 = vmul.f32 %v139, %v112
    %v170 = vmul.f32 %v140, %v112
    %v171 = vmul.f32 %v141, %v112
    %v172 = vmul.f32 %v142, %v112
    %v173 = vadd.f32 %v79, %v143
    %v174 = vadd.f32 %v79, %v144
    %v175 = vadd.f32 %v79, %v145
    %v176 = vadd.f32 %v79, %v146
    %v177 = vadd.f32 %v79, %v147
    %v178 = vadd.f32 %v79, %v148
    %v179 = vadd.f32 %v79, %v149
    %v180 = vadd.f32 %v79, %v150
    %v181 = vadd.f32 %v79, %v151
    %v182 = vadd.f32 %v79, %v152
    %v183 = vadd.f32 %v79, %v153
    %v184 = vadd.f32 %v79, %v154
    %v185 = vadd.f32 %v79, %v155
    %v186 = vadd.f32 %v79, %v156
    %v187 = vadd.f32 %v79, %v157
    %v188 = vadd.f32 %v79, %v158
    %v189 = vadd.f32 %v79, %v159
    %v190 = vadd.f32 %v79, %v160
    %v191 = vadd.f32 %v79, %v161
    %v192 = vadd.f32 %v79, %v162
    %v193 = vadd.f32 %v79, %v163
    %v194 = vadd.f32 %v79, %v164
    %v195 = vadd.f32 %v79, %v165
    %v196 = vadd.f32 %v79, %v166
    %v197 = vadd.f32 %v79, %v167
    %v198 = vadd.f32 %v79, %v168
    %v199 = vadd.f32 %v79, %v169
    %v200 = vadd.f32 %v79, %v170
    %v201 = vadd.f32 %v79, %v171
    %v202 = vadd.f32 %v79, %v172
    %203 = vst.msk [vmem:[#allocation7] sm:$0xf] %vm64, %v173
    %204 = vst.msk [vmem:[#allocation7 + $0x4] sm:$0xf] %vm64, %v174
    %205 = vst.msk [vmem:[#allocation7 + $0x8] sm:$0xf] %vm64, %v175
    %206 = vst.msk [vmem:[#allocation7 + $0xc] sm:$0xf] %vm64, %v176
    %207 = vst.msk [vmem:[#allocation7 + $0x10] sm:$0xf] %vm64, %v177
    %208 = vst.msk [vmem:[#allocation7 + $0x14] sm:$0xf] %vm64, %v178
    %209 = vst.msk [vmem:[#allocation7 + $0x18] sm:$0xf] %vm64, %v179
    %210 = vst.msk [vmem:[#allocation7 + $0x1c] sm:$0xf] %vm64, %v180
    %211 = vst.msk [vmem:[#allocation7 + $0x20] sm:$0xf] %vm64, %v181
    %212 = vst.msk [vmem:[#allocation7 + $0x24] sm:$0xf] %vm64, %v182
    %213 = vst.msk [vmem:[#allocation7 + $0x28] sm:$0xf] %vm64, %v183
    %214 = vst.msk [vmem:[#allocation7 + $0x2c] sm:$0xf] %vm64, %v184
    %215 = vst.msk [vmem:[#allocation7 + $0x30] sm:$0xf] %vm64, %v185
    %216 = vst.msk [vmem:[#allocation7 + $0x34] sm:$0xf] %vm64, %v186
    %217 = vst.msk [vmem:[#allocation7 + $0x38] sm:$0xf] %vm64, %v187
    %218 = vst.msk [vmem:[#allocation7 + $0x3c] sm:$0xf] %vm64, %v188
    %219 = vst.msk [vmem:[#allocation7 + $0x40] sm:$0xf] %vm64, %v189
    %220 = vst.msk [vmem:[#allocation7 + $0x44] sm:$0xf] %vm64, %v190
    %221 = vst.msk [vmem:[#allocation7 + $0x48] sm:$0xf] %vm64, %v191
    %222 = vst.msk [vmem:[#allocation7 + $0x4c] sm:$0xf] %vm64, %v192
    %223 = vst.msk [vmem:[#allocation7 + $0x50] sm:$0xf] %vm64, %v193
    %224 = vst.msk [vmem:[#allocation7 + $0x54] sm:$0xf] %vm64, %v194
    %225 = vst.msk [vmem:[#allocation7 + $0x58] sm:$0xf] %vm64, %v195
    %226 = vst.msk [vmem:[#allocation7 + $0x5c] sm:$0xf] %vm64, %v196
    %227 = vst.msk [vmem:[#allocation7 + $0x60] sm:$0xf] %vm64, %v197
    %228 = vst.msk [vmem:[#allocation7 + $0x64] sm:$0xf] %vm64, %v198
    %229 = vst.msk [vmem:[#allocation7 + $0x68] sm:$0xf] %vm64, %v199
    %230 = vst.msk [vmem:[#allocation7 + $0x6c] sm:$0xf] %vm64, %v200
    %231 = vst.msk [vmem:[#allocation7 + $0x70] sm:$0xf] %vm64, %v201
    %232 = vst.msk [vmem:[#allocation7 + $0x74] sm:$0xf] %vm64, %v202
    // Predicated region
    $region18: #{tpu_custom_call.1} parent=1 // pred_check
      _
    $region19: #{tpu_custom_call.1} parent=1 // pred_check_branch
      %234 = sbr.rel (0) target = $region21
    $region20: #{tpu_custom_call.1} parent=1 // pred_region
      %s236 = ssub.s32 1920, 1920
      %237 = vsyncadd [#allocation4], %s236
      %s238 = sshll.u32 [#allocation7], 4
      %s239 = int_to_ptr.vmem [resolvable:$true] %s238
      %244 = dma.vmem_to_hbm [thread:$0]  %s239, 1920, %s2, [#allocation4], 64, 64, 4
    $region21: #{tpu_custom_call.1} parent=1 // pred_fallthru
      _
    // Predicated region
    $region22: #{tpu_custom_call.1} parent=1 // pred_check
      _
    $region23: #{tpu_custom_call.1} parent=1 // pred_check_branch
      %246 = sbr.rel (0) target = $region25
    $region24: #{tpu_custom_call.1} parent=1 // pred_region
      %247 = dma.done [#allocation4], 1920
    $region25: #{tpu_custom_call.1} parent=1 // pred_fallthru
      _
    %248 = vsyncpa [#allocation3], 1
    %249 = vsyncpa [#allocation6], 1
    %250 = vsyncpa [#allocation4], 1

</llo_original>
